<compile_context>
chip_gen: v7x
topology: tpu7x:2x2x1
jax: 0.10.0
libtpu: 0.0.40
codegen_flags: <defaults>
</compile_context>

<pallas_src>
import functools

import jax
import jax.numpy as jnp
from jax.experimental import pallas as pl
from jax.experimental.pallas import tpu as pltpu


_LANE = 128
_MIN_GRID_STEPS = 8          # keep >= 8 steps when N allows (overlap + megacore)
_N_F32_TEMPS = 8             # allowance for full-block f32 intermediates in VMEM


# ----------------------------------------------------------------------------
# Elementwise math (traced inside the kernels)
# ----------------------------------------------------------------------------
def _focal_elementwise(x, t, pos_weight, gamma, logits, hard_targets):
    x = x.astype(jnp.float32)
    t = t.astype(jnp.float32)
    if logits:
        # binary_cross_entropy_with_logits (numerically stable form)
        bce = jnp.maximum(x, 0.0) - x * t + jnp.log1p(jnp.exp(-jnp.abs(x)))
        pt = jnp.exp(-bce)
    elif hard_targets:
        # Fast path for {0,1} targets: 1 transcendental/elem instead of 3.
        # (Gated behind an explicit flag; changes results for soft targets.)
        p_t = jnp.where(t >= 0.5, x, 1.0 - x)
        bce = -jnp.maximum(jnp.log(p_t), -100.0)
        pt = p_t
    else:
        # binary_cross_entropy with PyTorch's log clamp at -100
        log_p = jnp.maximum(jnp.log(x), -100.0)
        log_1mp = jnp.maximum(jnp.log(1.0 - x), -100.0)
        bce = -(t * log_p + (1.0 - t) * log_1mp)
        pt = jnp.exp(-bce)

    d = 1.0 - pt

    # Specialize small integer gammas (default gamma=2): float pow lowers to
    # exp(gamma*log(x)) -> 2 extra EUP transcendentals per element.
    g = float(gamma)
    if g == int(g) and 0 <= int(g) <= 8:
        gi = int(g)
        if gi == 0:
            mod = jnp.ones_like(d)
        else:
            mod = d
            for _ in range(gi - 1):
                mod = mod * d
    else:
        mod = d ** g

    fl = mod * bce
    if float(pos_weight) != 1.0:  # skip the multiply for the default pos_weight=1
        fl = jnp.float32(pos_weight) * fl
    return fl


def _lane_tree_fold(fl):
    """Pairwise-tree fold of the C/128 lane blocks -> (rows, 128) f32."""
    nblk = fl.shape[-1] // _LANE
    blocks = [fl[:, j * _LANE:(j + 1) * _LANE] for j in range(nblk)]
    while len(blocks) > 1:
        nxt = [blocks[i] + blocks[i + 1] for i in range(0, len(blocks) - 1, 2)]
        if len(blocks) % 2:
            nxt.append(blocks[-1])
        blocks = nxt
    return blocks[0]


# ----------------------------------------------------------------------------
# Kernels
# ----------------------------------------------------------------------------
def _focal_partial_sum_kernel(inp_ref, tgt_ref, out_ref, *, pos_weight, gamma,
                              logits, hard_targets, n_rows, row_tile):
    """reduce=True path: lane-dense (1, 128) partial sum per grid step."""
    fl = _focal_elementwise(inp_ref[...], tgt_ref[...], pos_weight, gamma,
                            logits, hard_targets)
    acc = _lane_tree_fold(fl)  # (row_tile, 128) f32
    if n_rows % row_tile != 0:
        # Tail masking: the last (partial) block contains unspecified padded
        # rows; zero them out before the sublane reduction (NaN-safe select).
        rem = n_rows - pl.program_id(0) * row_tile
        row_ids = jax.lax.broadcasted_iota(jnp.int32, acc.shape, 0)
        acc = jnp.where(row_ids < rem, acc, 0.0)
    out_ref[...] = jnp.sum(acc, axis=0, keepdims=True)


def _focal_map_kernel(inp_ref, tgt_ref, out_ref, *, pos_weight, gamma, logits,
                      hard_targets):
    """reduce=False path: elementwise focal loss (partial tail block writes are
    handled by Pallas, so no masking is needed here)."""
    fl = _focal_elementwise(inp_ref[...], tgt_ref[...], pos_weight, gamma,
                            logits, hard_targets)
    out_ref[...] = fl.astype(out_ref.dtype)


# ----------------------------------------------------------------------------
# Tiling / VMEM budgeting helpers
# ----------------------------------------------------------------------------
def _vmem_capacity_bytes():
    try:
        return int(pltpu.get_tpu_info().vmem_capacity_bytes)
    except Exception:
        return 64 * 1024 * 1024  # conservative (v7x per-TensorCore)


def _prefer_even_tiles(n, row_tile, row_align):
    """Mild preference for an even tile count (v7x: avoid one idle TC)."""
    num = -(-n // row_tile)
    if num <= 2 or num % 2 == 0:
        return row_tile
    cand = row_tile - row_align
    tried = 0
    while cand >= row_align and tried < 8:
        if (-(-n // cand)) % 2 == 0:
            return cand
        cand -= row_align
        tried += 1
    return row_tile


def _choose_row_tile(n, c, isz_in, isz_tgt, isz_out, row_align, reduce,
                     vmem_cap):
    """Largest aligned row tile whose working set fits a VMEM budget, with at
    least _MIN_GRID_STEPS grid steps when N is big enough."""
    if n <= row_align:
        return n  # full-extent block is always legal

    # Working set per row (bytes): double-buffered inputs + f32 temporaries
    # (+ double-buffered output block for the map path).
    per_row = c * (isz_in + isz_tgt) * 2 + c * 4 * _N_F32_TEMPS
    if not reduce:
        per_row += c * isz_out * 2
    budget = int(vmem_cap * 0.55)
    max_rows_bytes = max(row_align, (budget // per_row) // row_align * row_align)

    # Keep the grid deep enough for DMA/compute overlap + megacore sharding.
    if n >= _MIN_GRID_STEPS * row_align:
        max_rows_steps = max(row_align,
                             (n // _MIN_GRID_STEPS) // row_align * row_align)
    else:
        max_rows_steps = row_align

    row_tile = min(max_rows_bytes, max_rows_steps)
    row_tile = min(row_tile, -(-n // row_align) * row_align)  # <= padded N
    row_tile = max(row_tile, row_align)
    row_tile = _prefer_even_tiles(n, row_tile, row_align)
    return row_tile


# ----------------------------------------------------------------------------
# Public wrapper
# ----------------------------------------------------------------------------
def focal_loss(inputs, targets, *, pos_weight=1.0, gamma=2.0, logits=False,
               reduce=True, hard_targets=False):
    """JAX/Pallas equivalent of FocalLoss.forward (inputs/targets are (N, C))."""
    assert inputs.shape == targets.shape and inputs.ndim == 2
    n, c = inputs.shape
    assert c % _LANE == 0, "num_classes must be a multiple of 128 (pad if needed)"

    isz_in = jnp.dtype(inputs.dtype).itemsize
    isz_tgt = jnp.dtype(targets.dtype).itemsize
    out_dtype = inputs.dtype
    isz_out = jnp.dtype(out_dtype).itemsize
    # Sublane alignment: 8 rows for 4-byte dtypes, 16 for bf16/fp16, 32 for 1B.
    row_align = max(32 // isz_in, 32 // isz_tgt, 8)

    vmem_cap = _vmem_capacity_bytes()
    row_tile = _choose_row_tile(n, c, isz_in, isz_tgt, isz_out, row_align,
                                reduce, vmem_cap)
    num_tiles = pl.cdiv(n, row_tile)
    grid = (num_tiles,)

    in_spec = pl.BlockSpec((row_tile, c), lambda i: (i, 0))

    # VMEM limit computed from the actual working set (+25% headroom),
    # clamped to 75% of the generation's physical VMEM.
    io_bytes = 2 * row_tile * c * (isz_in + isz_tgt)
    io_bytes += 2 * _LANE * 4 if reduce else 2 * row_tile * c * isz_out
    temp_bytes = _N_F32_TEMPS * row_tile * c * 4
    vmem_limit = int((io_bytes + temp_bytes) * 1.25) + (1 << 20)
    vmem_limit = min(max(vmem_limit, 16 * 1024 * 1024), int(vmem_cap * 0.75))

    # Exact-ish cost estimate.
    if logits:
        trans_per = 3
    elif hard_targets:
        trans_per = 1
    else:
        trans_per = 3
    g = float(gamma)
    if not (g == int(g) and 0 <= int(g) <= 8):
        trans_per += 2  # float pow -> exp + log
    flops = 12 * n * c
    transcendentals = trans_per * n * c
    in_bytes = n * c * (isz_in + isz_tgt)

    kwargs = dict(pos_weight=float(pos_weight), gamma=float(gamma),
                  logits=bool(logits), hard_targets=bool(hard_targets))

    if reduce:
        kernel = functools.partial(_focal_partial_sum_kernel, n_rows=n,
                                   row_tile=row_tile, **kwargs)
        partials = pl.pallas_call(
            kernel,
            out_shape=jax.ShapeDtypeStruct((num_tiles, _LANE), jnp.float32),
            grid_spec=pltpu.PrefetchScalarGridSpec(
                num_scalar_prefetch=0,
                grid=grid,
                in_specs=[in_spec, in_spec],
                out_specs=pl.BlockSpec((1, _LANE), lambda i: (i, 0)),
            ),
            compiler_params=pltpu.CompilerParams(
                dimension_semantics=("parallel",),
                vmem_limit_bytes=vmem_limit),
            cost_estimate=pl.CostEstimate(
                flops=flops, transcendentals=transcendentals,
                bytes_accessed=in_bytes + num_tiles * _LANE * 4),
        )(inputs, targets)
        # Final tree reduce + mean scale done once in the wrapper.
        return (jnp.sum(partials) / jnp.float32(n * c)).astype(jnp.float32)
    else:
        kernel = functools.partial(_focal_map_kernel, **kwargs)
        return pl.pallas_call(
            kernel,
            out_shape=jax.ShapeDtypeStruct((n, c), out_dtype),
            grid_spec=pltpu.PrefetchScalarGridSpec(
                num_scalar_prefetch=0,
                grid=grid,
                in_specs=[in_spec, in_spec],
                out_specs=pl.BlockSpec((row_tile, c), lambda i: (i, 0)),
            ),
            compiler_params=pltpu.CompilerParams(
                dimension_semantics=("parallel",),
                vmem_limit_bytes=vmem_limit),
            cost_estimate=pl.CostEstimate(
                flops=flops, transcendentals=transcendentals,
                bytes_accessed=in_bytes + n * c * isz_out),
        )(inputs, targets)


# ----------------------------------------------------------------------------
# Pure-JAX reference (mirrors the PyTorch module)
# ----------------------------------------------------------------------------
def _reference(inputs, targets, pos_weight=1.0, gamma=2.0, logits=False,
               reduce=True):
    x = inputs.astype(jnp.float32)
    t = targets.astype(jnp.float32)
    if logits:
        bce = jnp.maximum(x, 0.0) - x * t + jnp.log1p(jnp.exp(-jnp.abs(x)))
    else:
        bce = -(t * jnp.maximum(jnp.log(x), -100.0)
                + (1.0 - t) * jnp.maximum(jnp.log(1.0 - x), -100.0))
    pt = jnp.exp(-bce)
    fl = pos_weight * (1.0 - pt) ** gamma * bce
    return jnp.mean(fl) if reduce else fl


if __name__ == "__main__":
    key = jax.random.PRNGKey(0)
    k1, k2, k3 = jax.random.split(key, 3)
    N, C = 8, 256  # small (batch, num_classes) multi-label setting

    # inputs are probabilities (logits=False default), targets are {0,1} floats
    inputs = jnp.clip(jax.nn.sigmoid(jax.random.normal(k1, (N, C), jnp.float32)),
                      0.01, 0.99)
    targets = (jax.random.uniform(k2, (N, C)) > 0.5).astype(jnp.float32)

    # default FocalLoss(): pos_weight=1, gamma=2, logits=False, reduce=True
    loss = jax.block_until_ready(focal_loss(inputs, targets))
    ref = _reference(inputs, targets)
    assert jnp.allclose(loss, ref, rtol=1e-5, atol=1e-6), (loss, ref)

    # non-reduced elementwise path
    fl_map = jax.block_until_ready(focal_loss(inputs, targets, reduce=False))
    ref_map = _reference(inputs, targets, reduce=False)
    assert jnp.allclose(fl_map, ref_map, rtol=1e-5, atol=1e-6)

    # hard-label fast path (1 transcendental/elem) -- matches for {0,1} targets
    loss_hard = jax.block_until_ready(
        focal_loss(inputs, targets, hard_targets=True))
    assert jnp.allclose(loss_hard, ref, rtol=1e-5, atol=1e-6), (loss_hard, ref)

    # non-default pos_weight / logits=True path (stable BCE-with-logits)
    logits_in = jax.random.normal(k1, (N, C), dtype=jnp.float32)
    loss2 = jax.block_until_ready(
        focal_loss(logits_in, targets, pos_weight=2.0, gamma=2.0, logits=True))
    ref2 = _reference(logits_in, targets, pos_weight=2.0, gamma=2.0, logits=True)
    assert jnp.allclose(loss2, ref2, rtol=1e-5, atol=1e-6), (loss2, ref2)

    # non-divisible N -> exercises cdiv grid + tail-row masking in the reduce path
    N2 = 12
    inp12 = jnp.clip(jax.nn.sigmoid(jax.random.normal(k3, (N2, C), jnp.float32)),
                     0.01, 0.99)
    tgt12 = (jax.random.uniform(k2, (N2, C)) > 0.5).astype(jnp.float32)
    loss12 = jax.block_until_ready(focal_loss(inp12, tgt12))
    ref12 = _reference(inp12, tgt12)
    assert jnp.allclose(loss12, ref12, rtol=1e-5, atol=1e-6), (loss12, ref12)

    # bf16 inputs DMA'd without wrapper upcast (f32 math in-kernel)
    N3 = 32
    inp_bf = jnp.clip(jax.nn.sigmoid(jax.random.normal(k1, (N3, C), jnp.float32)),
                      0.01, 0.99).astype(jnp.bfloat16)
    tgt_bf = (jax.random.uniform(k2, (N3, C)) > 0.5).astype(jnp.bfloat16)
    loss_bf = jax.block_until_ready(focal_loss(inp_bf, tgt_bf))
    ref_bf = _reference(inp_bf, tgt_bf)
    assert jnp.allclose(loss_bf, ref_bf, rtol=1e-5, atol=1e-6), (loss_bf, ref_bf)

    print("KERNEL_OK")
</pallas_src>

<mosaic_0001>
module attributes {stable_mosaic.version = 11 : i64} {
  func.func @_focal_partial_sum_kernel(%arg0: i32, %arg1: memref<8x256xf32, #tpu.memory_space<vmem>>, %arg2: memref<8x256xf32, #tpu.memory_space<vmem>>, %arg3: memref<1x128xf32, #tpu.memory_space<vmem>>) attributes {dimension_semantics = [#tpu.dimension_semantics<parallel>], iteration_bounds = array<i64: 1>, scalar_prefetch = 0 : i64, scratch_operands = 0 : i64, tpu.core_type = #tpu.core_type<tc>, window_params = [{transform_indices = @transform_0, window_bounds = array<i64: 8, 256>}, {transform_indices = @transform_1, window_bounds = array<i64: 8, 256>}, {transform_indices = @transform_2, window_bounds = array<i64: 1, 128>}]} {
    %c0 = arith.constant 0 : index
    %c0_0 = arith.constant 0 : index
    %0 = vector.load %arg1[%c0, %c0_0] : memref<8x256xf32, #tpu.memory_space<vmem>>, vector<8x256xf32>
    %c0_1 = arith.constant 0 : index
    %c0_2 = arith.constant 0 : index
    %1 = vector.load %arg2[%c0_1, %c0_2] : memref<8x256xf32, #tpu.memory_space<vmem>>, vector<8x256xf32>
    %2 = math.log %0 : vector<8x256xf32>
    %cst = arith.constant -1.000000e+02 : f32
    %3 = vector.broadcast %cst : f32 to vector<8x256xf32>
    %4 = arith.maximumf %2, %3 : vector<8x256xf32>
    %cst_3 = arith.constant 1.000000e+00 : f32
    %5 = vector.broadcast %cst_3 : f32 to vector<8x256xf32>
    %6 = arith.subf %5, %0 : vector<8x256xf32>
    %7 = math.log %6 : vector<8x256xf32>
    %cst_4 = arith.constant -1.000000e+02 : f32
    %8 = vector.broadcast %cst_4 : f32 to vector<8x256xf32>
    %9 = arith.maximumf %7, %8 : vector<8x256xf32>
    %10 = arith.mulf %1, %4 : vector<8x256xf32>
    %cst_5 = arith.constant 1.000000e+00 : f32
    %11 = vector.broadcast %cst_5 : f32 to vector<8x256xf32>
    %12 = arith.subf %11, %1 : vector<8x256xf32>
    %13 = arith.mulf %12, %9 : vector<8x256xf32>
    %14 = arith.addf %10, %13 : vector<8x256xf32>
    %cst_6 = arith.constant 0.000000e+00 : f32
    %15 = vector.broadcast %cst_6 : f32 to vector<8x256xf32>
    %16 = arith.subf %15, %14 : vector<8x256xf32>
    %cst_7 = arith.constant 0.000000e+00 : f32
    %17 = vector.broadcast %cst_7 : f32 to vector<8x256xf32>
    %18 = arith.subf %17, %16 : vector<8x256xf32>
    %19 = math.exp %18 : vector<8x256xf32>
    %cst_8 = arith.constant 1.000000e+00 : f32
    %20 = vector.broadcast %cst_8 : f32 to vector<8x256xf32>
    %21 = arith.subf %20, %19 : vector<8x256xf32>
    %22 = arith.mulf %21, %21 : vector<8x256xf32>
    %23 = arith.mulf %22, %16 : vector<8x256xf32>
    %24 = vector.extract_strided_slice %23 {offsets = [0, 0], sizes = [8, 128], strides = [1, 1]} : vector<8x256xf32> to vector<8x128xf32>
    %25 = vector.extract_strided_slice %23 {offsets = [0, 128], sizes = [8, 128], strides = [1, 1]} : vector<8x256xf32> to vector<8x128xf32>
    %26 = arith.addf %24, %25 : vector<8x128xf32>
    %cst_9 = arith.constant dense<0.000000e+00> : vector<128xf32>
    %27 = vector.multi_reduction <add>, %26, %cst_9 [0] : vector<8x128xf32> to vector<128xf32>
    %28 = vector.shape_cast %27 : vector<128xf32> to vector<1x128xf32>
    %c0_10 = arith.constant 0 : index
    %c0_11 = arith.constant 0 : index
    %29 = vector.load %arg3[%c0_10, %c0_11] : memref<1x128xf32, #tpu.memory_space<vmem>>, vector<1x128xf32>
    tpu.vector_store %arg3[%c0_10, %c0_11], %28 {strides = array<i32>} : memref<1x128xf32, #tpu.memory_space<vmem>>, vector<1x128xf32>,
    return
  }
  func.func @transform_0(%arg0: i32) -> (i32, i32) {
    %c0_i32 = arith.constant 0 : i32
    %c0_i32_0 = arith.constant 0 : i32
    return %arg0, %c0_i32 : i32, i32
  }
  func.func @transform_1(%arg0: i32) -> (i32, i32) {
    %c0_i32 = arith.constant 0 : i32
    %c0_i32_0 = arith.constant 0 : i32
    return %arg0, %c0_i32 : i32, i32
  }
  func.func @transform_2(%arg0: i32) -> (i32, i32) {
    %c0_i32 = arith.constant 0 : i32
    %c0_i32_0 = arith.constant 0 : i32
    return %arg0, %c0_i32 : i32, i32
  }
}

</mosaic_0001>

<llo_original>
// kernel: tpu_custom_call.1
$region0: #{tpu_custom_call.1}
  #allocation0 [shape = 'u32[]', space=smem, size = 0x4, offset = 0x4, fixed_abs, tag = 'smem constant byte address 0x4 - core index']
  #allocation1 [shape = 'u32[144,128]{1,0:T(1,128)}', space=vmem, size = 0x12000, scoped, tag = 'internal scratch']
  %s0 = inlined_call_operand.hbm [shape: f32[8,256], index: 0, kind: input, shape index: {}]
  %s1 = inlined_call_operand.hbm [shape: f32[8,256], index: 1, kind: input, shape index: {}]
  %s2 = inlined_call_operand.hbm [shape: f32[1,128], index: 2, kind: output, shape index: {}]
  %s3 = sld [smem:[#allocation0]]
  $region26: #{tpu_custom_call.1} parent=0
    _
  %s5 = ssub.s32 1, %s3
  %s6 = scalar_select 0, %s5, %s3
  $region1: #{tpu_custom_call.1} parent=0
    #allocation2 [shape = 'u8[8192]{0}', space=vmem, size = 0x2000, scoped, tag = 'input window, operand 0, single buffered']
    #allocation3 [shape = 's32[1]{0}', space=sflag, size = 0x4, scoped, tag = 'scoped memory for tpu_custom_call.1']
    #allocation4 [shape = 's32[1]{0}', space=sflag, size = 0x4, scoped, tag = 'scoped memory for tpu_custom_call.1']
    #allocation5 [shape = 'u8[8192]{0}', space=vmem, size = 0x2000, scoped, tag = 'input window, operand 1, single buffered']
    #allocation6 [shape = 's32[1]{0}', space=sflag, size = 0x4, scoped, tag = 'scoped memory for tpu_custom_call.1']
    #allocation7 [shape = 'u8[512]{0}', space=vmem, size = 0x400, scoped, tag = 'output window, operand 0, single buffered']
    %7 = vsyncpa [#allocation3], 0
    %8 = vsyncpa [#allocation6], 0
    %9 = vsyncpa [#allocation4], 0
    // Predicated region
    $region2: #{tpu_custom_call.1} parent=1 // pred_check
      _
    $region3: #{tpu_custom_call.1} parent=1 // pred_check_branch
      %11 = sbr.rel (0) target = $region5
    $region4: #{tpu_custom_call.1} parent=1 // pred_region
      %s13 = ssub.s32 256, 256
      %14 = vsyncadd [#allocation3], %s13
      %s16 = sshll.u32 [#allocation2], 4
      %s17 = int_to_ptr.vmem [resolvable:$true] %s16
      %19 = dma.hbm_to_vmem [thread:$0]  %s0, 256, %s17, [#allocation3]
    $region5: #{tpu_custom_call.1} parent=1 // pred_fallthru
      _
    // Predicated region
    $region6: #{tpu_custom_call.1} parent=1 // pred_check
      _
    $region7: #{tpu_custom_call.1} parent=1 // pred_check_branch
      %21 = sbr.rel (0) target = $region9
    $region8: #{tpu_custom_call.1} parent=1 // pred_region
      %s23 = ssub.s32 256, 256
      %24 = vsyncadd [#allocation6], %s23
      %s26 = sshll.u32 [#allocation5], 4
      %s27 = int_to_ptr.vmem [resolvable:$true] %s26
      %29 = dma.hbm_to_vmem [thread:$0]  %s1, 256, %s27, [#allocation6]
    $region9: #{tpu_custom_call.1} parent=1 // pred_fallthru
      _
    // Predicated region
    $region10: #{tpu_custom_call.1} parent=1 // pred_check
      _
    $region11: #{tpu_custom_call.1} parent=1 // pred_check_branch
      %31 = sbr.rel (0) target = $region13
    $region12: #{tpu_custom_call.1} parent=1 // pred_region
      %32 = dma.done [#allocation3], 256
    $region13: #{tpu_custom_call.1} parent=1 // pred_fallthru
      _
    // Predicated region
    $region14: #{tpu_custom_call.1} parent=1 // pred_check
      _
    $region15: #{tpu_custom_call.1} parent=1 // pred_check_branch
      %34 = sbr.rel (0) target = $region17
    $region16: #{tpu_custom_call.1} parent=1 // pred_region
      %35 = dma.done [#allocation6], 256
    $region17: #{tpu_custom_call.1} parent=1 // pred_fallthru
      _
    %v36 = vld [vmem:[#allocation2] sm:$0xff]
    %v37 = vld [vmem:[#allocation2 + $0x8] sm:$0xff]
    %v38 = vld [vmem:[#allocation5] sm:$0xff]
    %v39 = vld [vmem:[#allocation5 + $0x8] sm:$0xff]
    %v40 = vlog2.pop %v36
    %v41 = vmul.f32 %v40, 0.6931472
    %v42 = vlog2.pop %v37
    %v43 = vmul.f32 %v42, 0.6931472
    %v44 = vmax.f32 %v41, -100.0
    %v45 = vmax.f32 %v43, -100.0
    %v46 = vsub.f32 1.0, %v36
    %v47 = vsub.f32 1.0, %v37
    %v48 = vlog2.pop %v46
    %v49 = vmul.f32 %v48, 0.6931472
    %v50 = vlog2.pop %v47
    %v51 = vmul.f32 %v50, 0.6931472
    %v52 = vmax.f32 %v49, -100.0
    %v53 = vmax.f32 %v51, -100.0
    %v54 = vmul.f32 %v38, %v44
    %v55 = vmul.f32 %v39, %v45
    %v56 = vsub.f32 1.0, %v38
    %v57 = vsub.f32 1.0, %v39
    %v58 = vmul.f32 %v56, %v52
    %v59 = vmul.f32 %v57, %v53
    %v60 = vadd.f32 %v54, %v58
    %v61 = vadd.f32 %v55, %v59
    %v62 = vsub.f32 0.0, %v60
    %v63 = vsub.f32 0.0, %v61
    %v64 = vsub.f32 0.0, %v62
    %v65 = vsub.f32 0.0, %v63
    %v66 = vmul.f32 %v64, 1.442695
    %v67 = vpow.pop %v66
    %v68 = vmul.f32 %v65, 1.442695
    %v69 = vpow.pop %v68
    %v70 = vsub.f32 1.0, %v67
    %v71 = vsub.f32 1.0, %v69
    %v72 = vmul.f32 %v70, %v70
    %v73 = vmul.f32 %v71, %v71
    %v74 = vmul.f32 %v72, %v62
    %v75 = vmul.f32 %v73, %v63
    %v76 = vadd.f32 %v74, %v75
    %v77 = vrot.slane %v76, 4
    %v78 = vadd.f32 %v76, %v77
    %v79 = vrot.slane %v78, 2
    %v80 = vadd.f32 %v78, %v79
    %v81 = vrot.slane %v80, 1
    %v82 = vadd.f32 %v80, %v81
    %83 = vst [vmem:[#allocation7] sm:$0x1] %v82
    // Predicated region
    $region18: #{tpu_custom_call.1} parent=1 // pred_check
      _
    $region19: #{tpu_custom_call.1} parent=1 // pred_check_branch
      %85 = sbr.rel (0) target = $region21
    $region20: #{tpu_custom_call.1} parent=1 // pred_region
      %s87 = ssub.s32 16, 16
      %88 = vsyncadd [#allocation4], %s87
      %s90 = sshll.u32 [#allocation7], 4
      %s91 = int_to_ptr.vmem [resolvable:$true] %s90
      %93 = dma.vmem_to_hbm [thread:$0]  %s91, 16, %s2, [#allocation4]
    $region21: #{tpu_custom_call.1} parent=1 // pred_fallthru
      _
    // Predicated region
    $region22: #{tpu_custom_call.1} parent=1 // pred_check
      _
    $region23: #{tpu_custom_call.1} parent=1 // pred_check_branch
      %95 = sbr.rel (0) target = $region25
    $region24: #{tpu_custom_call.1} parent=1 // pred_region
      %96 = dma.done [#allocation4], 16
    $region25: #{tpu_custom_call.1} parent=1 // pred_fallthru
      _
    %97 = vsyncpa [#allocation3], 1
    %98 = vsyncpa [#allocation6], 1
    %99 = vsyncpa [#allocation4], 1

</llo_original>
